<compile_context>
chip_gen: v5e
topology: v5e:2x2
jax: 0.10.0
libtpu: 0.0.40
codegen_flags: <defaults>
</compile_context>

<pallas_src>
import functools

import jax
import jax.numpy as jnp
from jax import lax
from jax.experimental import pallas as pl
from jax.experimental.pallas import tpu as pltpu


def _round_up(x: int, m: int) -> int:
    return -(-x // m) * m


def _sublane(itemsize: int) -> int:
    # Minimum sublane multiple per dtype width: 8 (4B), 16 (2B), 32 (1B).
    return max(8, 8 * (4 // max(1, itemsize)))


# ----------------------------------------------------------------------------
# Kernel 1: fused EMA update (elementwise, VPU, mem-bound)
#   new_w = m * ema_w + (1 - m) * orig_w     (weight tiled over a 2-D grid)
#   new_b = m * ema_b + (1 - m) * orig_b     (bias: single resident block)
# ----------------------------------------------------------------------------
_EMA_BLOCK_BYTES = 1 << 20   # ~1 MiB per operand block: 3 operands, double
                             # buffered ~6 MiB -> safely under v5e's 16 MiB
                             # scoped-VMEM default (no special flags needed).
_EMA_MAX_COLS = 2048         # lane tile used when the weight's last dim is
                             # 128-aligned and wider than this.


def _ema_update_kernel(m_ref, ew_ref, eb_ref, ow_ref, ob_ref,
                       w_out_ref, b_out_ref):
    m = m_ref[0, 0]                       # SMEM scalar (f32), runtime value
    one_minus_m = 1.0 - m
    # Weight tile: unique per grid step; the output aliases the (donated)
    # persistent EMA weight, so this is a true in-place HBM update.
    w_out_ref[...] = (ew_ref[...].astype(jnp.float32) * m
                      + ow_ref[...].astype(jnp.float32) * one_minus_m
                      ).astype(w_out_ref.dtype)
    # Bias block is resident across the whole grid; recomputing it every step
    # is idempotent VPU work on VMEM-resident data (its bytes only move once).
    # Its output is deliberately NOT aliased so a megacore split can never see
    # a half-updated bias through an alias.
    b_out_ref[...] = (eb_ref[...].astype(jnp.float32) * m
                      + ob_ref[...].astype(jnp.float32) * one_minus_m
                      ).astype(b_out_ref.dtype)


def _ema_weight_tiles(shape, itemsize):
    R, C = shape
    sub = _sublane(itemsize)
    # Lane (last) dim: tile only when 128-aligned and large; otherwise the full
    # width is the only lane-legal block.
    tc = _EMA_MAX_COLS if (C % 128 == 0 and C > _EMA_MAX_COLS) else C
    # TODO(synk): a weight whose last dim is both huge and not 128-aligned
    # cannot be column-tiled without padding; the block stays (sub, C) then.
    rows_budget = max(sub, (_EMA_BLOCK_BYTES // max(1, tc * itemsize)) // sub * sub)
    tr = min(rows_budget, _round_up(R, sub))
    if tr >= R:
        tr = R                            # full-extent rows is always legal
    # v7x has 2 TensorCores: make sure the grid has >= 2 steps when there is
    # enough work so dimension_semantics=("parallel", ...) splits the row axis.
    if pl.cdiv(R, tr) * pl.cdiv(C, tc) < 2 and R > sub:
        tr = max(sub, _round_up(-(-R // 2), sub))
    return tr, tc


@functools.partial(jax.jit, donate_argnums=(0,))
def _ema_linear_update(ema_w, ema_b, orig_w, orig_b, m_arr):
    """One fused pallas_call: in-place EMA of the weight + EMA of the bias."""
    R, C = ema_w.shape
    tr, tc = _ema_weight_tiles((R, C), jnp.dtype(ema_w.dtype).itemsize)
    grid = (pl.cdiv(R, tr), pl.cdiv(C, tc))

    eb2 = ema_b.reshape(1, -1)            # bitcast reshape; bias stays tiny
    ob2 = orig_b.reshape(1, -1)
    cb = eb2.shape[1]

    new_w, new_b2 = pl.pallas_call(
        _ema_update_kernel,
        out_shape=(jax.ShapeDtypeStruct(ema_w.shape, ema_w.dtype),
                   jax.ShapeDtypeStruct(eb2.shape, ema_b.dtype)),
        grid=grid,
        in_specs=[
            pl.BlockSpec(memory_space=pltpu.MemorySpace.SMEM),   # momentum (1,1)
            pl.BlockSpec((tr, tc), lambda i, j: (i, j)),         # EMA weight
            pl.BlockSpec((1, cb), lambda i, j: (0, 0)),          # EMA bias
            pl.BlockSpec((tr, tc), lambda i, j: (i, j)),         # orig weight
            pl.BlockSpec((1, cb), lambda i, j: (0, 0)),          # orig bias
        ],
        out_specs=(
            pl.BlockSpec((tr, tc), lambda i, j: (i, j)),
            pl.BlockSpec((1, cb), lambda i, j: (0, 0)),
        ),
        # True in-place update of the persistent, donated EMA weight slab.
        input_output_aliases={1: 0},
        compiler_params=pltpu.CompilerParams(
            dimension_semantics=("parallel", "arbitrary")),
    )(m_arr, ema_w, eb2, orig_w, ob2)
    return new_w, new_b2.reshape(ema_b.shape)


# ----------------------------------------------------------------------------
# Kernel 2: Linear forward  y = x @ W.T + b  (MXU, tiled, no in-kernel .T)
# ----------------------------------------------------------------------------
def _linear_kernel_f32out(x_ref, w_ref, b_ref, o_ref, *, cast_bf16):
    """f32 output: accumulate directly in the resident output block."""
    k = pl.program_id(2)

    @pl.when(k == 0)
    def _():
        o_ref[...] = jnp.zeros_like(o_ref)

    x = x_ref[...]
    w = w_ref[...]
    if cast_bf16:
        x = x.astype(jnp.bfloat16)
        w = w.astype(jnp.bfloat16)
    # Contract dim 1 of x (tm, tk) with dim 1 of w (tn, tk): no XLU transpose.
    o_ref[...] += lax.dot_general(
        x, w, dimension_numbers=(((1,), (1,)), ((), ())),
        preferred_element_type=jnp.float32)

    @pl.when(k == pl.num_programs(2) - 1)
    def _():
        o_ref[...] += b_ref[...].astype(jnp.float32)


def _linear_kernel_acc(x_ref, w_ref, b_ref, o_ref, acc_ref, *, cast_bf16):
    """Non-f32 output: f32 VMEM accumulator, cast on the last K step."""
    k = pl.program_id(2)

    @pl.when(k == 0)
    def _():
        acc_ref[...] = jnp.zeros_like(acc_ref)

    x = x_ref[...]
    w = w_ref[...]
    if cast_bf16:
        x = x.astype(jnp.bfloat16)
        w = w.astype(jnp.bfloat16)
    acc_ref[...] += lax.dot_general(
        x, w, dimension_numbers=(((1,), (1,)), ((), ())),
        preferred_element_type=jnp.float32)

    @pl.when(k == pl.num_programs(2) - 1)
    def _():
        o_ref[...] = (acc_ref[...] + b_ref[...].astype(jnp.float32)
                      ).astype(o_ref.dtype)


@functools.partial(jax.jit, static_argnames=("use_bf16_matmul",))
def linear_forward(x, weight, bias, *, use_bf16_matmul=False):
    B, D_in = x.shape
    D_out = weight.shape[0]
    sub = _sublane(jnp.dtype(x.dtype).itemsize)

    # Pad every dimension up to a bounded tile multiple (never a full-dim
    # fallback tile): blocks stay VMEM-safe on ragged dims, the out_spec stays
    # lane-dense, and zero-padding K is numerically exact.
    M = _round_up(B, sub)
    if M >= 512 and M % 256 == 0:
        tm = 256
    elif M >= 128:
        tm = 128
        M = _round_up(M, 128)
    else:
        tm = M
    N = _round_up(D_out, 128)
    tn = 256 if (N >= 512 and N % 256 == 0) else 128   # 128-granular is v5e-safe
    K = _round_up(D_in, 128)
    if K <= 2048:
        tk = K                       # fully resident K: a single "arbitrary" step
    else:
        tk = next(t for t in (2048, 1024, 512, 256, 128) if K % t == 0)

    x_p = x if (M == B and K == D_in) else jnp.pad(x, ((0, M - B), (0, K - D_in)))
    w_p = weight if (N == D_out and K == D_in) else jnp.pad(
        weight, ((0, N - D_out), (0, K - D_in)))
    b_p = (bias if N == D_out else jnp.pad(bias, (0, N - D_out))).reshape(1, N)

    out_is_f32 = jnp.dtype(x.dtype) == jnp.float32
    if out_is_f32:
        kernel = functools.partial(_linear_kernel_f32out, cast_bf16=use_bf16_matmul)
        scratch = ()
    else:
        kernel = functools.partial(_linear_kernel_acc, cast_bf16=use_bf16_matmul)
        scratch = (pltpu.VMEM((tm, tn), jnp.float32),)

    # Worst-case working set (tm=tn=256, tk=2048, f32) is ~9 MiB double-buffered
    # -> fits the 16 MiB scoped-VMEM default even on v5e, so no vmem override.
    out = pl.pallas_call(
        kernel,
        out_shape=jax.ShapeDtypeStruct((M, N), x.dtype),
        grid=(M // tm, N // tn, K // tk),
        in_specs=[
            pl.BlockSpec((tm, tk), lambda i, j, k: (i, k)),
            pl.BlockSpec((tn, tk), lambda i, j, k: (j, k)),
            pl.BlockSpec((1, tn), lambda i, j, k: (0, j)),
        ],
        out_specs=pl.BlockSpec((tm, tn), lambda i, j, k: (i, j)),
        scratch_shapes=scratch,
        compiler_params=pltpu.CompilerParams(
            dimension_semantics=("parallel", "parallel", "arbitrary")),
    )(x_p, w_p, b_p)

    if (M, N) != (B, D_out):
        out = out[:B, :D_out]
    return out


# ----------------------------------------------------------------------------
# Plain-Python module glue mirroring the PyTorch classes
# ----------------------------------------------------------------------------
class Linear:
    """Minimal stand-in for the wrapped `original_model` (torch.nn.Linear)."""

    def __init__(self, params):
        # params: {"weight": (D_out, D_in), "bias": (D_out,)}
        self.params = dict(params)

    def __call__(self, x):
        return linear_forward(x, self.params["weight"], self.params["bias"])


class EMA:
    """JAX/Pallas port of homura.modules.ema.EMA (wrapping a Linear model)."""

    def __init__(self, original_model: Linear, momentum: float = 0.999,
                 copy_buffer: bool = False):
        if not 0 <= momentum <= 1:
            raise ValueError(f"Invalid momentum: {momentum}")
        self.momentum = momentum
        self.copy_buffer = copy_buffer
        self._original_model = original_model
        # copy.deepcopy(original_model): snapshot params into fresh buffers so
        # the EMA update can donate/alias them without touching the original.
        self._ema_model = Linear({k: jnp.copy(v)
                                  for k, v in original_model.params.items()})
        self.training = True

    @property
    def original_model(self) -> Linear:
        return self._original_model

    @property
    def ema_model(self) -> Linear:
        return self._ema_model

    def _update(self):
        # Fused torch._foreach_mul_(e_p, m); torch._foreach_add_(e_p, o_p, 1-m)
        m_arr = jnp.full((1, 1), self.momentum, dtype=jnp.float32)
        new_w, new_b = _ema_linear_update(
            self._ema_model.params["weight"],
            self._ema_model.params["bias"],
            self._original_model.params["weight"],
            self._original_model.params["bias"],
            m_arr)
        self._ema_model.params = {"weight": new_w, "bias": new_b}
        # TODO(synk): the wrapped Linear has no buffers, so the float-buffer EMA
        # / non-float buffer copy branches of the reference are no-ops here.

    def __call__(self, x):
        if self.training:
            self._update()
            return self._original_model(x)
        return self._ema_model(x)


if __name__ == "__main__":
    key = jax.random.PRNGKey(0)
    k_x, k_w, k_b, k_dw = jax.random.split(key, 4)
    B, D_in, D_out = 8, 32, 32

    x = jax.random.normal(k_x, (B, D_in), dtype=jnp.float32)
    weight = 0.1 * jax.random.normal(k_w, (D_out, D_in), dtype=jnp.float32)
    bias = 0.1 * jax.random.normal(k_b, (D_out,), dtype=jnp.float32)

    model = Linear({"weight": weight, "bias": bias})
    ema = EMA(model, momentum=0.999)

    # Simulate a training step on the original model (perturb its weight) so
    # the EMA update is non-trivial.
    model.params["weight"] = model.params["weight"] + 0.01 * jax.random.normal(
        k_dw, (D_out, D_in), dtype=jnp.float32)

    # Training-mode forward: EMA parameter update, then forward through original.
    y_train = ema(x)
    jax.block_until_ready(y_train)

    # Eval-mode forward: forward through the EMA model.
    ema.training = False
    y_eval = ema(x)
    jax.block_until_ready(y_eval)

    # Optional bf16-MXU fast path of the forward (looser numerics).
    y_bf16 = linear_forward(x, model.params["weight"], model.params["bias"],
                            use_bf16_matmul=True)
    jax.block_until_ready(y_bf16)

    # Plain-JAX reference check
    m = ema.momentum
    w_ema_ref = m * weight + (1.0 - m) * model.params["weight"]
    b_ema_ref = bias                      # original bias unchanged -> EMA == bias
    y_train_ref = x @ model.params["weight"].T + model.params["bias"]
    y_eval_ref = x @ w_ema_ref.T + b_ema_ref

    assert jnp.allclose(ema.ema_model.params["weight"], w_ema_ref, atol=1e-6)
    assert jnp.allclose(ema.ema_model.params["bias"], b_ema_ref, atol=1e-6)
    assert jnp.allclose(y_train, y_train_ref, atol=1e-5)
    assert jnp.allclose(y_eval, y_eval_ref, atol=1e-5)
    assert jnp.allclose(y_bf16, y_train_ref, atol=5e-2)

    print("KERNEL_OK")
</pallas_src>

<mosaic_0001>
module attributes {stable_mosaic.version = 11 : i64} {
  func.func @_ema_update_kernel(%arg0: i32, %arg1: i32, %arg2: memref<1x1xf32, #tpu.memory_space<smem>>, %arg3: memref<16x32xf32, #tpu.memory_space<vmem>>, %arg4: memref<1x32xf32, #tpu.memory_space<vmem>>, %arg5: memref<16x32xf32, #tpu.memory_space<vmem>>, %arg6: memref<1x32xf32, #tpu.memory_space<vmem>>, %arg7: memref<16x32xf32, #tpu.memory_space<vmem>>, %arg8: memref<1x32xf32, #tpu.memory_space<vmem>>) attributes {dimension_semantics = [#tpu.dimension_semantics<parallel>, #tpu.dimension_semantics<arbitrary>], iteration_bounds = array<i64: 2, 1>, scalar_prefetch = 0 : i64, scratch_operands = 0 : i64, tpu.core_type = #tpu.core_type<tc>, window_params = [{transform_indices = @transform_0, window_bounds = array<i64: 1, 1>}, {transform_indices = @transform_1, window_bounds = array<i64: 16, 32>}, {pipeline_mode = #tpu.pipeline_mode<synchronous>, transform_indices = @transform_2, window_bounds = array<i64: 1, 32>}, {transform_indices = @transform_3, window_bounds = array<i64: 16, 32>}, {pipeline_mode = #tpu.pipeline_mode<synchronous>, transform_indices = @transform_4, window_bounds = array<i64: 1, 32>}, {transform_indices = @transform_5, window_bounds = array<i64: 16, 32>}, {pipeline_mode = #tpu.pipeline_mode<synchronous>, transform_indices = @transform_6, window_bounds = array<i64: 1, 32>}]} {
    %c0 = arith.constant 0 : index
    %c0_0 = arith.constant 0 : index
    %0 = memref.load %arg2[%c0, %c0_0] : memref<1x1xf32, #tpu.memory_space<smem>>
    %cst = arith.constant 1.000000e+00 : f32
    %1 = arith.subf %cst, %0 : f32
    %c0_1 = arith.constant 0 : index
    %c0_2 = arith.constant 0 : index
    %2 = vector.load %arg3[%c0_1, %c0_2] : memref<16x32xf32, #tpu.memory_space<vmem>>, vector<16x32xf32>
    %3 = vector.broadcast %0 : f32 to vector<16x32xf32>
    %4 = arith.mulf %2, %3 : vector<16x32xf32>
    %c0_3 = arith.constant 0 : index
    %c0_4 = arith.constant 0 : index
    %5 = vector.load %arg5[%c0_3, %c0_4] : memref<16x32xf32, #tpu.memory_space<vmem>>, vector<16x32xf32>
    %6 = vector.broadcast %1 : f32 to vector<16x32xf32>
    %7 = arith.mulf %5, %6 : vector<16x32xf32>
    %8 = arith.addf %4, %7 : vector<16x32xf32>
    %c0_5 = arith.constant 0 : index
    %c0_6 = arith.constant 0 : index
    %9 = vector.load %arg7[%c0_5, %c0_6] : memref<16x32xf32, #tpu.memory_space<vmem>>, vector<16x32xf32>
    tpu.vector_store %arg7[%c0_5, %c0_6], %8 {strides = array<i32>} : memref<16x32xf32, #tpu.memory_space<vmem>>, vector<16x32xf32>,
    %c0_7 = arith.constant 0 : index
    %c0_8 = arith.constant 0 : index
    %10 = vector.load %arg4[%c0_7, %c0_8] : memref<1x32xf32, #tpu.memory_space<vmem>>, vector<1x32xf32>
    %11 = vector.broadcast %0 : f32 to vector<1x32xf32>
    %12 = arith.mulf %10, %11 : vector<1x32xf32>
    %c0_9 = arith.constant 0 : index
    %c0_10 = arith.constant 0 : index
    %13 = vector.load %arg6[%c0_9, %c0_10] : memref<1x32xf32, #tpu.memory_space<vmem>>, vector<1x32xf32>
    %14 = vector.broadcast %1 : f32 to vector<1x32xf32>
    %15 = arith.mulf %13, %14 : vector<1x32xf32>
    %16 = arith.addf %12, %15 : vector<1x32xf32>
    %c0_11 = arith.constant 0 : index
    %c0_12 = arith.constant 0 : index
    %17 = vector.load %arg8[%c0_11, %c0_12] : memref<1x32xf32, #tpu.memory_space<vmem>>, vector<1x32xf32>
    tpu.vector_store %arg8[%c0_11, %c0_12], %16 {strides = array<i32>} : memref<1x32xf32, #tpu.memory_space<vmem>>, vector<1x32xf32>,
    return
  }
  func.func @transform_0(%arg0: i32, %arg1: i32) -> (i32, i32) {
    %c0_i32 = arith.constant 0 : i32
    %c0_i32_0 = arith.constant 0 : i32
    %c0_i32_1 = arith.constant 0 : i32
    return %c0_i32, %c0_i32_0 : i32, i32
  }
  func.func @transform_1(%arg0: i32, %arg1: i32) -> (i32, i32) {
    %c0_i32 = arith.constant 0 : i32
    return %arg0, %arg1 : i32, i32
  }
  func.func @transform_2(%arg0: i32, %arg1: i32) -> (i32, i32) {
    %c0_i32 = arith.constant 0 : i32
    %c0_i32_0 = arith.constant 0 : i32
    %c0_i32_1 = arith.constant 0 : i32
    return %c0_i32, %c0_i32_0 : i32, i32
  }
  func.func @transform_3(%arg0: i32, %arg1: i32) -> (i32, i32) {
    %c0_i32 = arith.constant 0 : i32
    return %arg0, %arg1 : i32, i32
  }
  func.func @transform_4(%arg0: i32, %arg1: i32) -> (i32, i32) {
    %c0_i32 = arith.constant 0 : i32
    %c0_i32_0 = arith.constant 0 : i32
    %c0_i32_1 = arith.constant 0 : i32
    return %c0_i32, %c0_i32_0 : i32, i32
  }
  func.func @transform_5(%arg0: i32, %arg1: i32) -> (i32, i32) {
    %c0_i32 = arith.constant 0 : i32
    return %arg0, %arg1 : i32, i32
  }
  func.func @transform_6(%arg0: i32, %arg1: i32) -> (i32, i32) {
    %c0_i32 = arith.constant 0 : i32
    %c0_i32_0 = arith.constant 0 : i32
    %c0_i32_1 = arith.constant 0 : i32
    return %c0_i32, %c0_i32_0 : i32, i32
  }
}

</mosaic_0001>

<llo_original>
// kernel: _ema_linear_update.1
$region0: #{_ema_linear_update.1}
  #allocation0 [shape = 'u32[]', space=smem, size = 0x4, offset = 0x4, fixed_abs, tag = 'smem constant byte address 0x4 - core index']
  #allocation1 [shape = 'u32[72,128]{1,0:T(1,128)}', space=vmem, size = 0x9000, scoped, tag = 'internal scratch']
  #allocation2 [shape = 'f32[1,1]{1,0:T(1,128)S(6)}', space=smem, size = 0x200, scoped, tag = 'scoped memory for _ema_linear_update.1']
  %s0 = inlined_call_operand.<no memory space> [shape: f32[1,1], index: 0, kind: input, shape index: {}]
  %s1 = inlined_call_operand.hbm [shape: f32[32,32], index: 1, kind: input, shape index: {}, may-alias: {1,5}]
  %s2 = inlined_call_operand.vmem [shape: f32[1,32], index: 2, kind: input, shape index: {}]
  %s3 = inlined_call_operand.hbm [shape: f32[32,32], index: 3, kind: input, shape index: {}]
  %s4 = inlined_call_operand.vmem [shape: f32[1,32], index: 4, kind: input, shape index: {}]
  %s5 = inlined_call_operand.hbm [shape: f32[32,32], index: 5, kind: output, shape index: {0}, may-alias: {1,5}]
  %s6 = inlined_call_operand.hbm [shape: f32[1,32], index: 6, kind: output, shape index: {1}]
  %7 = xla_tuple %s5, %s6
  %s8 = sld [smem:[#allocation0]]
  $region69: #{_ema_linear_update.1} parent=0
    _
  %s10 = ssub.s32 1, %s8
  %s11 = scalar_select 0, %s10, %s8
  %12 = sst [smem:[#allocation2]] %s0
  $region1: #{_ema_linear_update.1} parent=0
    #allocation3 [shape = 'u8[16384]{0}', space=vmem, size = 0x4000, scoped, tag = 'input window, operand 1']
    #allocation4 [shape = 's32[2]{0}', space=sflag, size = 0x8, scoped, tag = 'scoped memory for _ema_linear_update.1']
    #allocation5 [shape = 's32[2]{0}', space=sflag, size = 0x8, scoped, tag = 'scoped memory for _ema_linear_update.1']
    #allocation6 [shape = 'u8[16384]{0}', space=vmem, size = 0x4000, scoped, tag = 'input window, operand 3']
    #allocation7 [shape = 's32[2]{0}', space=sflag, size = 0x8, scoped, tag = 'scoped memory for _ema_linear_update.1']
    #allocation8 [shape = 'u8[16384]{0}', space=vmem, size = 0x4000, scoped, tag = 'output window, operand 0']
    #allocation9 [shape = 'u8[512]{0}', space=vmem, size = 0x400, scoped, tag = 'output window, operand 1, single buffered']
    #allocation10 [shape = 's32[1]{0}', space=sflag, size = 0x4, scoped, tag = 'scoped memory for _ema_linear_update.1']
    %13 = vsyncpa [#allocation4], 0
    %s14 = scalar_lea.sflag [#allocation4], 1
    %15 = vsyncpa %s14, 0
    %16 = vsyncpa [#allocation7], 0
    %s17 = scalar_lea.sflag [#allocation7], 1
    %18 = vsyncpa %s17, 0
    %19 = vsyncpa [#allocation5], 0
    %s20 = scalar_lea.sflag [#allocation5], 1
    %21 = vsyncpa %s20, 0
    %22 = vsyncpa [#allocation10], 0
    loop: start=0, step=1, limit=4
    $region2: #{_ema_linear_update.1} parent=1 // loop_pre_header
      _
    $region3: #{_ema_linear_update.1} parent=1 // loop_header
      %s24 = sphi 0, %s28
      %p25 = scmp.ge.s32.totalorder %s24, 4
      %s31 = sphi 0, %s43
      %s32 = sphi 0, %s39
      %s33 = sphi 0, %s31
      %s34 = sphi 0, %s32
      %s35 = sphi 0, %s33
      %s36 = sphi 0, %s34
      %s44 = sphi 0, %s44
      %s46 = sphi 0, %s44
      %s47 = sphi 0, %s46
      %s61 = sphi 0, %s47
      %s69 = sphi 0, %s71
      %s72 = sphi 0, %s69
      %s73 = sphi 0, %s72
      %s89 = sphi 0, %s73
      %s93 = sphi 0, %s93
      %s95 = sphi 0, %s93
      %s96 = sphi 0, %s95
      %s110 = sphi 0, %s96
      %s118 = sphi 0, %s120
      %s121 = sphi 0, %s118
      %s122 = sphi 0, %s121
      %s138 = sphi 0, %s122
      %s142 = sphi 0, %s142
      %s144 = sphi 0, %s142
      %s145 = sphi 0, %s144
      %s159 = sphi 0, %s145
      %s167 = sphi 0, %s169
      %s170 = sphi 0, %s167
      %s171 = sphi 0, %s170
      %s187 = sphi 0, %s171
      %s191 = sphi 0, %s191
      %s193 = sphi 0, %s191
      %s194 = sphi 0, %s193
      %s208 = sphi 0, %s194
    $region4: #{_ema_linear_update.1} parent=1 // loop_header_branch
      %27 = sbr.rel (%p25) target = $region8
    $region5: #{_ema_linear_update.1} parent=1 // loop_body
      %s29 = ssub.s32 %s24, 1
      %s30 = ssub.s32 %s24, 2
      %s37 = sadd.s32 1, %s32
      %p38 = scmp.ge.s32.totalorder %s37, 1
      %s39 = scalar_select %p38, 0, %s37
      %s40 = sadd.s32 1, %s31
      %s41 = scalar_select %p38, %s40, %s31
      %p42 = scmp.ge.s32.totalorder %s41, 2
      %s43 = scalar_select %p42, 0, %s41
      %s45 = sadd.s32 %s44, 1
      %p48 = scmp.eq.s32.totalorder %s24, 1
      %p49 = scmp.ne.s32.totalorder %s44, %s46
      %p50 = scmp.eq.s32.totalorder %s24, 0
      %p51 = por %p49, %p50
      %p52 = scmp.ne.s32.totalorder %s44, %s46
      %p53 = scmp.eq.s32.totalorder %s29, 1
      %p54 = por %p52, %p53
      %p55 = scmp.ne.s32.totalorder %s46, %s47
      %p56 = scmp.eq.s32.totalorder %s29, 0
      %p57 = por %p55, %p56
      %p58 = scmp.ne.s32.totalorder %s46, %s47
      %p59 = scmp.eq.s32.totalorder %s30, 1
      %p60 = por %p58, %p59
      %p62 = scmp.ne.s32.totalorder %s47, %s61
      %p63 = scmp.eq.s32.totalorder %s30, 0
      %p64 = por %p62, %p63
      %s65 = ssub.s32 %s31, %s43
      %s66 = ssub.s32 %s32, %s39
      %s67 = sor.u32 %s65, %s66
      %p68 = scmp.eq.s32.totalorder %s67, 0
      %s70 = sadd.s32 %s69, 1
      %s71 = scalar_select %p68, %s69, %s70
      %p74 = pneg %p68
      %p75 = scmp.eq.s32.totalorder %s24, 1
      %p76 = por %p74, %p75
      %p77 = scmp.ne.s32.totalorder %s69, %s72
      %p78 = scmp.eq.s32.totalorder %s24, 0
      %p79 = por %p77, %p78
      %p80 = scmp.ne.s32.totalorder %s69, %s72
      %p81 = scmp.eq.s32.totalorder %s29, 1
      %p82 = por %p80, %p81
      %p83 = scmp.ne.s32.totalorder %s72, %s73
      %p84 = scmp.eq.s32.totalorder %s29, 0
      %p85 = por %p83, %p84
      %p86 = scmp.ne.s32.totalorder %s72, %s73
      %p87 = scmp.eq.s32.totalorder %s30, 1
      %p88 = por %p86, %p87
      %p90 = scmp.ne.s32.totalorder %s73, %s89
      %p91 = scmp.eq.s32.totalorder %s30, 0
      %p92 = por %p90, %p91
      %s94 = sadd.s32 %s93, 1
      %p97 = scmp.eq.s32.totalorder %s24, 1
      %p98 = scmp.ne.s32.totalorder %s93, %s95
      %p99 = scmp.eq.s32.totalorder %s24, 0
      %p100 = por %p98, %p99
      %p101 = scmp.ne.s32.totalorder %s93, %s95
      %p102 = scmp.eq.s32.totalorder %s29, 1
      %p103 = por %p101, %p102
      %p104 = scmp.ne.s32.totalorder %s95, %s96
      %p105 = scmp.eq.s32.totalorder %s29, 0
      %p106 = por %p104, %p105
      %p107 = scmp.ne.s32.totalorder %s95, %s96
      %p108 = scmp.eq.s32.totalorder %s30, 1
      %p109 = por %p107, %p108
      %p111 = scmp.ne.s32.totalorder %s96, %s110
      %p112 = scmp.eq.s32.totalorder %s30, 0
      %p113 = por %p111, %p112
      %s114 = ssub.s32 %s31, %s43
      %s115 = ssub.s32 %s32, %s39
      %s116 = sor.u32 %s114, %s115
      %p117 = scmp.eq.s32.totalorder %s116, 0
      %s119 = sadd.s32 %s118, 1
      %s120 = scalar_select %p117, %s118, %s119
      %p123 = pneg %p117
      %p124 = scmp.eq.s32.totalorder %s24, 1
      %p125 = por %p123, %p124
      %p126 = scmp.ne.s32.totalorder %s118, %s121
      %p127 = scmp.eq.s32.totalorder %s24, 0
      %p128 = por %p126, %p127
      %p129 = scmp.ne.s32.totalorder %s118, %s121
      %p130 = scmp.eq.s32.totalorder %s29, 1
      %p131 = por %p129, %p130
      %p132 = scmp.ne.s32.totalorder %s121, %s122
      %p133 = scmp.eq.s32.totalorder %s29, 0
      %p134 = por %p132, %p133
      %p135 = scmp.ne.s32.totalorder %s121, %s122
      %p136 = scmp.eq.s32.totalorder %s30, 1
      %p137 = por %p135, %p136
      %p139 = scmp.ne.s32.totalorder %s122, %s138
      %p140 = scmp.eq.s32.totalorder %s30, 0
      %p141 = por %p139, %p140
      %s143 = sadd.s32 %s142, 1
      %p146 = scmp.eq.s32.totalorder %s24, 1
      %p147 = scmp.ne.s32.totalorder %s142, %s144
      %p148 = scmp.eq.s32.totalorder %s24, 0
      %p149 = por %p147, %p148
      %p150 = scmp.ne.s32.totalorder %s142, %s144
      %p151 = scmp.eq.s32.totalorder %s29, 1
      %p152 = por %p150, %p151
      %p153 = scmp.ne.s32.totalorder %s144, %s145
      %p154 = scmp.eq.s32.totalorder %s29, 0
      %p155 = por %p153, %p154
      %p156 = scmp.ne.s32.totalorder %s144, %s145
      %p157 = scmp.eq.s32.totalorder %s30, 1
      %p158 = por %p156, %p157
      %p160 = scmp.ne.s32.totalorder %s145, %s159
      %p161 = scmp.eq.s32.totalorder %s30, 0
      %p162 = por %p160, %p161
      %s163 = ssub.s32 %s31, %s43
      %s164 = ssub.s32 %s32, %s39
      %s165 = sor.u32 %s163, %s164
      %p166 = scmp.eq.s32.totalorder %s165, 0
      %s168 = sadd.s32 %s167, 1
      %s169 = scalar_select %p166, %s167, %s168
      %p172 = pneg %p166
      %p173 = scmp.eq.s32.totalorder %s24, 1
      %p174 = por %p172, %p173
      %p175 = scmp.ne.s32.totalorder %s167, %s170
      %p176 = scmp.eq.s32.totalorder %s24, 0
      %p177 = por %p175, %p176
      %p178 = scmp.ne.s32.totalorder %s167, %s170
      %p179 = scmp.eq.s32.totalorder %s29, 1
      %p180 = por %p178, %p179
      %p181 = scmp.ne.s32.totalorder %s170, %s171
      %p182 = scmp.eq.s32.totalorder %s29, 0
      %p183 = por %p181, %p182
      %p184 = scmp.ne.s32.totalorder %s170, %s171
      %p185 = scmp.eq.s32.totalorder %s30, 1
      %p186 = por %p184, %p185
      %p188 = scmp.ne.s32.totalorder %s171, %s187
      %p189 = scmp.eq.s32.totalorder %s30, 0
      %p190 = por %p188, %p189
      %s192 = sadd.s32 %s191, 1
      %p195 = scmp.eq.s32.totalorder %s24, 1
      %p196 = scmp.ne.s32.totalorder %s191, %s193
      %p197 = scmp.eq.s32.totalorder %s24, 0
      %p198 = por %p196, %p197
      %p199 = scmp.ne.s32.totalorder %s191, %s193
      %p200 = scmp.eq.s32.totalorder %s29, 1
      %p201 = por %p199, %p200
      %p202 = scmp.ne.s32.totalorder %s193, %s194
      %p203 = scmp.eq.s32.totalorder %s29, 0
      %p204 = por %p202, %p203
      %p205 = scmp.ne.s32.totalorder %s193, %s194
      %p206 = scmp.eq.s32.totalorder %s30, 1
      %p207 = por %p205, %p206
      %p209 = scmp.ne.s32.totalorder %s194, %s208
      %p210 = scmp.eq.s32.totalorder %s30, 0
      %p211 = por %p209, %p210
      %p212 = scmp.le.s32.totalorder 1, %s24
      %p213 = scmp.lt.s32.totalorder %s24, 3
      %p214 = pnand %p212, %p213
      %p215 = pneg %p214
      // Predicated region
      $region9: #{_ema_linear_update.1} parent=5 // pred_check
        _
      $region10: #{_ema_linear_update.1} parent=5 // pred_check_branch
        %217 = sbr.rel (%p214) target = $region12
      $region11: #{_ema_linear_update.1} parent=5 // pred_region
        %s218 = ssub.s32 %s24, 1
        // Predicated region
        $region13: #{_ema_linear_update.1} parent=11 // pred_check
          %p219 = pneg %p57
        $region14: #{_ema_linear_update.1} parent=11 // pred_check_branch
          %221 = sbr.rel (%p219) target = $region16
        $region15: #{_ema_linear_update.1} parent=11 // pred_region
          _
        $region16: #{_ema_linear_update.1} parent=11 // pred_fallthru
          _
        // Predicated region
        $region17: #{_ema_linear_update.1} parent=11 // pred_check
          %p222 = pneg %p106
        $region18: #{_ema_linear_update.1} parent=11 // pred_check_branch
          %224 = sbr.rel (%p222) target = $region20
        $region19: #{_ema_linear_update.1} parent=11 // pred_region
          _
        $region20: #{_ema_linear_update.1} parent=11 // pred_fallthru
          _
        // Predicated region
        $region21: #{_ema_linear_update.1} parent=11 // pred_check
          %p225 = pneg %p155
        $region22: #{_ema_linear_update.1} parent=11 // pred_check_branch
          %227 = sbr.rel (%p225) target = $region24
        $region23: #{_ema_linear_update.1} parent=11 // pred_region
          _
        $region24: #{_ema_linear_update.1} parent=11 // pred_fallthru
          _
      $region12: #{_ema_linear_update.1} parent=5 // pred_fallthru
        _
      %p228 = scmp.lt.s32.totalorder %s24, 2
      // Predicated region
      $region25: #{_ema_linear_update.1} parent=5 // pred_check
        %p229 = pneg %p228
      $region26: #{_ema_linear_update.1} parent=5 // pred_check_branch
        %231 = sbr.rel (%p229) target = $region28
      $region27: #{_ema_linear_update.1} parent=5 // pred_region
        // Predicated region
        $region29: #{_ema_linear_update.1} parent=27 // pred_check
          %p232 = pneg %p79
        $region30: #{_ema_linear_update.1} parent=27 // pred_check_branch
          %234 = sbr.rel (%p232) target = $region32
        $region31: #{_ema_linear_update.1} parent=27 // pred_region
          %s235 = sand.u32 %s69, 1
          %s236 = scalar_lea.sflag [#allocation4], %s235
          %s237 = sand.u32 %s69, 1
          %s238 = smul.addr %s237, 16
          %s239 = scalar_lea.vmem [#allocation3], %s238
          %s240 = smul.u32 2, %s31
          %242 = vsyncadd %s236, 0
          %s243 = sadd.s32 %s32, %s240
          %s244 = smul.addr %s243, 8
          %s245 = scalar_lea.hbm %s1, %s244
          %s246 = sshll.u32 %s245, 4
          %s247 = int_to_ptr.hbm [resolvable:$true] %s246
          %s248 = sshll.u32 %s239, 4
          %s249 = int_to_ptr.vmem [resolvable:$true] %s248
          %254 = dma.hbm_to_vmem [thread:$0]  %s247, 256, %s249, %s236, 128, 128, 8
        $region32: #{_ema_linear_update.1} parent=27 // pred_fallthru
          _
        // Predicated region
        $region33: #{_ema_linear_update.1} parent=27 // pred_check
          %p255 = pneg %p128
        $region34: #{_ema_linear_update.1} parent=27 // pred_check_branch
          %257 = sbr.rel (%p255) target = $region36
        $region35: #{_ema_linear_update.1} parent=27 // pred_region
          %s258 = sand.u32 %s118, 1
          %s259 = scalar_lea.sflag [#allocation7], %s258
          %s260 = sand.u32 %s118, 1
          %s261 = smul.addr %s260, 16
          %s262 = scalar_lea.vmem [#allocation6], %s261
          %s263 = smul.u32 2, %s31
          %265 = vsyncadd %s259, 0
          %s266 = sadd.s32 %s32, %s263
          %s267 = smul.addr %s266, 8
          %s268 = scalar_lea.hbm %s3, %s267
          %s269 = sshll.u32 %s268, 4
          %s270 = int_to_ptr.hbm [resolvable:$true] %s269
          %s271 = sshll.u32 %s262, 4
          %s272 = int_to_ptr.vmem [resolvable:$true] %s271
          %277 = dma.hbm_to_vmem [thread:$0]  %s270, 256, %s272, %s259, 128, 128, 8
        $region36: #{_ema_linear_update.1} parent=27 // pred_fallthru
          _
      $region28: #{_ema_linear_update.1} parent=5 // pred_fallthru
        _
      %p278 = scmp.le.s32.totalorder 1, %s24
      %p279 = scmp.lt.s32.totalorder %s24, 3
      %p280 = pnand %p278, %p279
      %p281 = pneg %p280
      // Predicated region
      $region37: #{_ema_linear_update.1} parent=5 // pred_check
        _
      $region38: #{_ema_linear_update.1} parent=5 // pred_check_branch
        %283 = sbr.rel (%p280) target = $region40
      $region39: #{_ema_linear_update.1} parent=5 // pred_region
        %s284 = ssub.s32 %s24, 1
        %s285 = sand.u32 %s72, 1
        %s286 = scalar_lea.sflag [#allocation4], %s285
        %s287 = sand.u32 %s72, 1
        %s288 = smul.addr %s287, 16
        %s289 = scalar_lea.vmem [#allocation3], %s288
        // Predicated region
        $region41: #{_ema_linear_update.1} parent=39 // pred_check
          %p290 = pneg %p85
        $region42: #{_ema_linear_update.1} parent=39 // pred_check_branch
          %292 = sbr.rel (%p290) target = $region44
        $region43: #{_ema_linear_update.1} parent=39 // pred_region
          %294 = dma.done %s286, 256
        $region44: #{_ema_linear_update.1} parent=39 // pred_fallthru
          _
        %s295 = sand.u32 %s121, 1
        %s296 = scalar_lea.sflag [#allocation7], %s295
        %s297 = sand.u32 %s121, 1
        %s298 = smul.addr %s297, 16
        %s299 = scalar_lea.vmem [#allocation6], %s298
        // Predicated region
        $region45: #{_ema_linear_update.1} parent=39 // pred_check
          %p300 = pneg %p134
        $region46: #{_ema_linear_update.1} parent=39 // pred_check_branch
          %302 = sbr.rel (%p300) target = $region48
        $region47: #{_ema_linear_update.1} parent=39 // pred_region
          %304 = dma.done %s296, 256
        $region48: #{_ema_linear_update.1} parent=39 // pred_fallthru
          _
        %p305 = pneg %p57
        %p306 = pneg %p54
        %s307 = sand.u32 %s72, 1
        %s308 = scalar_lea.sflag [#allocation4], %s307
        %s309 = sand.u32 %s72, 1
        %s310 = smul.addr %s309, 16
        %s311 = scalar_lea.vmem [#allocation3], %s310
        %p312 = pneg %p85
        %p313 = pneg %p82
        %p314 = pneg %p106
        %p315 = pneg %p103
        %s316 = sand.u32 %s121, 1
        %s317 = scalar_lea.sflag [#allocation7], %s316
        %s318 = sand.u32 %s121, 1
        %s319 = smul.addr %s318, 16
        %s320 = scalar_lea.vmem [#allocation6], %s319
        %p321 = pneg %p134
        %p322 = pneg %p131
        %p323 = pneg %p155
        %p324 = pneg %p152
        %p325 = pneg %p183
        %p326 = pneg %p180
        %s327 = sand.u32 %s170, 1
        %s328 = scalar_lea.sflag [#allocation5], %s327
        %s329 = sand.u32 %s170, 1
        %s330 = smul.addr %s329, 16
        %s331 = scalar_lea.vmem [#allocation8], %s330
        %p332 = pneg %p204
        %p333 = pneg %p201
        %s334 = smul.u32 2, %s33
        %s335 = smul.u32 2, %s33
        %s336 = smul.u32 2, %s33
        %s337 = sld [smem:[#allocation2]]
        %s338 = ssub.f32 1.0, %s337
        %v339 = vld [vmem:[%s289] sm:$0xff]
        %v340 = vld [vmem:[%s289 + $0x8] sm:$0xff]
        %v341 = vstv %s337
        %v342 = vmul.f32 %v339, %v341
        %v343 = vmul.f32 %v340, %v341
        %v344 = vld [vmem:[%s299] sm:$0xff]
        %v345 = vld [vmem:[%s299 + $0x8] sm:$0xff]
        %v346 = vstv %s338
        %v347 = vmul.f32 %v344, %v346
        %v348 = vmul.f32 %v345, %v346
        %v349 = vadd.f32 %v342, %v347
        %v350 = vadd.f32 %v343, %v348
        %vm351 = vcmask 261120
        %352 = vst.msk [vmem:[%s331] sm:$0xff] %vm351, %v349
        %353 = vst.msk [vmem:[%s331 + $0x8] sm:$0xff] %vm351, %v350
        %v354 = vld [vmem:[%s2] sm:$0x1]
        %v355 = vmul.f32 %v354, %v341
        %v356 = vld [vmem:[%s4] sm:$0x1]
        %v357 = vmul.f32 %v356, %v346
        %v358 = vadd.f32 %v355, %v357
        %vm359 = vcmask 253952
        %360 = vst.msk [vmem:[#allocation9] sm:$0x1] %vm359, %v358
        %s361 = sand.u32 %s170, 1
        %s362 = scalar_lea.sflag [#allocation5], %s361
        %s363 = sand.u32 %s170, 1
        %s364 = smul.addr %s363, 16
        %s365 = scalar_lea.vmem [#allocation8], %s364
        // Predicated region
        $region49: #{_ema_linear_update.1} parent=39 // pred_check
          %p366 = pneg %p180
        $region50: #{_ema_linear_update.1} parent=39 // pred_check_branch
          %368 = sbr.rel (%p366) target = $region52
        $region51: #{_ema_linear_update.1} parent=39 // pred_region
          %s369 = smul.u32 2, %s33
          %371 = vsyncadd %s362, 0
          %s372 = sadd.s32 %s34, %s369
          %s373 = smul.addr %s372, 8
          %s374 = scalar_lea.hbm %s5, %s373
          %s375 = sshll.u32 %s365, 4
          %s376 = int_to_ptr.vmem [resolvable:$true] %s375
          %s377 = sshll.u32 %s374, 4
          %s378 = int_to_ptr.hbm [resolvable:$true] %s377
          %383 = dma.vmem_to_hbm [thread:$0]  %s376, 256, %s378, %s362, 128, 128, 8
        $region52: #{_ema_linear_update.1} parent=39 // pred_fallthru
          _
        // Predicated region
        $region53: #{_ema_linear_update.1} parent=39 // pred_check
          %p384 = pneg %p201
        $region54: #{_ema_linear_update.1} parent=39 // pred_check_branch
          %386 = sbr.rel (%p384) target = $region56
        $region55: #{_ema_linear_update.1} parent=39 // pred_region
          %388 = vsyncadd [#allocation10], 0
          %s390 = sshll.u32 [#allocation9], 4
          %s391 = int_to_ptr.vmem [resolvable:$true] %s390
          %s392 = sshll.u32 %s6, 4
          %s393 = int_to_ptr.hbm [resolvable:$true] %s392
          %395 = dma.vmem_to_hbm [thread:$0]  %s391, 16, %s393, [#allocation10]
        $region56: #{_ema_linear_update.1} parent=39 // pred_fallthru
          _
        // Predicated region
        $region57: #{_ema_linear_update.1} parent=39 // pred_check
          %p396 = pneg %p201
        $region58: #{_ema_linear_update.1} parent=39 // pred_check_branch
          %398 = sbr.rel (%p396) target = $region60
        $region59: #{_ema_linear_update.1} parent=39 // pred_region
          %400 = dma.done [#allocation10], 16
        $region60: #{_ema_linear_update.1} parent=39 // pred_fallthru
          _
      $region40: #{_ema_linear_update.1} parent=5 // pred_fallthru
        _
      %p401 = scmp.le.s32.totalorder 2, %s24
      // Predicated region
      $region61: #{_ema_linear_update.1} parent=5 // pred_check
        %p402 = pneg %p401
      $region62: #{_ema_linear_update.1} parent=5 // pred_check_branch
        %404 = sbr.rel (%p402) target = $region64
      $region63: #{_ema_linear_update.1} parent=5 // pred_region
        %s405 = ssub.s32 %s24, 2
        // Predicated region
        $region65: #{_ema_linear_update.1} parent=63 // pred_check
          %p406 = pneg %p186
        $region66: #{_ema_linear_update.1} parent=63 // pred_check_branch
          %408 = sbr.rel (%p406) target = $region68
        $region67: #{_ema_linear_update.1} parent=63 // pred_region
          %s409 = sand.u32 %s171, 1
          %s410 = scalar_lea.sflag [#allocation5], %s409
          %s411 = sand.u32 %s171, 1
          %s412 = smul.addr %s411, 16
          %s413 = scalar_lea.vmem [#allocation8], %s412
          %415 = dma.done %s410, 256
        $region68: #{_ema_linear_update.1} parent=63 // pred_fallthru
          _
      $region64: #{_ema_linear_update.1} parent=5 // pred_fallthru
        _
    $region6: #{_ema_linear_update.1} parent=1 // loop_footer
      %s28 = sadd.s32 1, %s24
    $region7: #{_ema_linear_update.1} parent=1 // loop_footer_branch
      %23 = sbr.rel target = $region3
    $region8: #{_ema_linear_update.1} parent=1 // loop_exit
      _
    %416 = vsyncpa [#allocation4], 1
    %s417 = scalar_lea.sflag [#allocation4], 1
    %418 = vsyncpa %s417, 1
    %419 = vsyncpa [#allocation7], 1
    %s420 = scalar_lea.sflag [#allocation7], 1
    %421 = vsyncpa %s420, 1
    %422 = vsyncpa [#allocation5], 1
    %s423 = scalar_lea.sflag [#allocation5], 1
    %424 = vsyncpa %s423, 1
    %425 = vsyncpa [#allocation10], 1

</llo_original>
